<compile_context>
chip_gen: v7x
topology: tpu7x:2x2x1
jax: 0.10.0
libtpu: 0.0.40
codegen_flags: <defaults>
</compile_context>

<pallas_src>
import functools

import jax
import jax.numpy as jnp
from jax import lax
from jax.experimental import pallas as pl
from jax.experimental.pallas import tpu as pltpu


def _conv_stats_kernel(xcol_ref, w_ref, bias_ref, conv_ref, stats_ref, *,
                       hw_valid, hw_padded, tile_p):
    """One (image, pixel-tile) grid step: fused im2col matmul + bias + partial BN stats.

    xcol_ref : (1, R, TILE_P)     patch matrix tile, R = K*K*Cin, pixels on lanes
    w_ref    : (Cout, R)          conv weight (contraction on lanes)
    bias_ref : (Cout, 1)
    conv_ref : (1, Cout, TILE_P)  f32 conv output tile (lane-dense store)
    stats_ref: (1, 1, Cout, 2)    per-tile partial [sum, sum_of_squares] per channel
    """
    x = xcol_ref[0, :, :]                                              # (R, TILE_P)
    acc = jnp.dot(w_ref[...], x, preferred_element_type=jnp.float32)  # (Cout, TILE_P)
    acc = acc + bias_ref[...]
    conv_ref[0, :, :] = acc.astype(conv_ref.dtype)

    # Partial BatchNorm statistics; mask padded pixel columns (static check).
    acc_m = acc
    if hw_padded != hw_valid:
        col = pl.program_id(1) * tile_p + lax.broadcasted_iota(
            jnp.int32, (1, tile_p), 1)
        acc_m = jnp.where(col < hw_valid, acc, 0.0)
    s = jnp.sum(acc_m, axis=1, keepdims=True)             # (Cout, 1)
    ss = jnp.sum(acc_m * acc, axis=1, keepdims=True)      # acc^2 on valid cols only
    stats_ref[0, 0, :, :] = jnp.concatenate([s, ss], axis=1)


def _bn_relu_kernel(conv_ref, scale_ref, shift_ref, out_ref):
    """Normalize + ReLU over one lane-dense (Cout, TILE) tile."""
    y = conv_ref[0, :, :] * scale_ref[...] + shift_ref[...]
    out_ref[0, :, :] = jnp.maximum(y, 0.0).astype(out_ref.dtype)


def _pick_conv_tile(hw, r, cout, budget_bytes=10 * 1024 * 1024, cap=2048):
    """Lane-tile for the matmul pass: biggest multiple of 128 within a VMEM budget."""
    per_lane = (r + cout) * 4 * 2            # f32 input + output, double-buffered
    t = (budget_bytes // per_lane) // 128 * 128
    t = max(128, min(cap, t))
    t = min(t, ((hw + 127) // 128) * 128)    # never larger than padded HW
    return t


def _pick_ew_tile(tile_p, num_t, cout, budget_bytes=8 * 1024 * 1024, cap=4096):
    """Lane-tile for the elementwise pass: a multiple of tile_p that divides HWp."""
    divisors = sorted({d for i in range(1, int(num_t ** 0.5) + 1) if num_t % i == 0
                       for d in (i, num_t // i)}, reverse=True)
    for d in divisors:
        cand = tile_p * d
        if cand <= cap and cout * cand * 4 * 4 <= budget_bytes:
            return cand
    return tile_p


def basic_block_2d(x, weight, bias, gamma, beta, *, stride=1, padding=1, eps=1e-5):
    """Forward pass of BasicBlock2D: Conv2d -> BatchNorm2d(train mode) -> ReLU.

    x      : (N, Cin, H, W)        float32, NCHW (PyTorch layout)
    weight : (Cout, Cin, K, K)     PyTorch Conv2d weight layout
    bias   : (Cout,) or None       Conv2d bias
    gamma, beta : (Cout,)          BatchNorm2d affine parameters
    returns: (N, Cout, Hout, Wout) NCHW
    """
    N, Cin, H, W = x.shape
    Cout, Cin_w, K, K2 = weight.shape
    assert Cin_w == Cin and K == K2
    Hout = (H + 2 * padding - K) // stride + 1
    Wout = (W + 2 * padding - K) // stride + 1
    HW = Hout * Wout
    R = Cin * K * K

    # ---- glue: pad + im2col (contraction on sublanes, pixels on lanes) ----
    xf = x.astype(jnp.float32)
    xpad = jnp.pad(xf, ((0, 0), (0, 0), (padding, padding), (padding, padding)))
    taps = [xpad[:, :, kh:kh + (Hout - 1) * stride + 1:stride,
                       kw:kw + (Wout - 1) * stride + 1:stride]
            for kh in range(K) for kw in range(K)]           # each (N, Cin, Hout, Wout)
    xcol = jnp.stack(taps, axis=2).reshape(N, R, HW)         # row order (ci, kh, kw)

    TILE_P = _pick_conv_tile(HW, R, Cout)
    num_t = (HW + TILE_P - 1) // TILE_P
    HWp = num_t * TILE_P
    if HWp != HW:
        xcol = jnp.pad(xcol, ((0, 0), (0, 0), (0, HWp - HW)))

    w2 = weight.reshape(Cout, R).astype(jnp.float32)         # same (ci, kh, kw) row order
    if bias is None:
        bias2 = jnp.zeros((Cout, 1), jnp.float32)
    else:
        bias2 = bias.reshape(Cout, 1).astype(jnp.float32)

    kernel1 = functools.partial(_conv_stats_kernel,
                                hw_valid=HW, hw_padded=HWp, tile_p=TILE_P)
    cost1 = pl.CostEstimate(
        flops=2 * N * HWp * Cout * R,
        transcendentals=0,
        bytes_accessed=(xcol.size + w2.size + N * Cout * HWp + N * num_t * Cout * 2) * 4)

    conv_out, stats = pl.pallas_call(
        kernel1,
        out_shape=(jax.ShapeDtypeStruct((N, Cout, HWp), jnp.float32),
                   jax.ShapeDtypeStruct((N, num_t, Cout, 2), jnp.float32)),
        grid=(N, num_t),
        in_specs=[
            pl.BlockSpec((1, R, TILE_P), lambda n, t: (n, 0, t)),
            pl.BlockSpec((Cout, R), lambda n, t: (0, 0)),
            pl.BlockSpec((Cout, 1), lambda n, t: (0, 0)),
        ],
        out_specs=(
            pl.BlockSpec((1, Cout, TILE_P), lambda n, t: (n, 0, t)),
            pl.BlockSpec((1, 1, Cout, 2), lambda n, t: (n, t, 0, 0)),
        ),
        compiler_params=pltpu.CompilerParams(
            dimension_semantics=("parallel", "parallel")),
        cost_estimate=cost1,
    )(xcol, w2, bias2)

    # ---- tiny per-channel BN parameter math (train-mode batch statistics) ----
    totals = jnp.sum(stats, axis=(0, 1))                     # (Cout, 2)
    count = jnp.float32(N * HW)
    mean = totals[:, 0] / count
    var = jnp.maximum(totals[:, 1] / count - mean * mean, 0.0)   # biased variance
    inv = lax.rsqrt(var + eps)
    g32 = gamma.astype(jnp.float32)
    scale = (g32 * inv).reshape(Cout, 1)
    shift = (beta.astype(jnp.float32) - mean * g32 * inv).reshape(Cout, 1)

    # ---- elementwise BN + ReLU pass (wider lane tile, optional in-place alias) ----
    TILE_E = _pick_ew_tile(TILE_P, num_t, Cout)
    num_te = HWp // TILE_E
    out_dtype = x.dtype
    aliases = {0: 0} if out_dtype == jnp.float32 else {}

    out_flat = pl.pallas_call(
        _bn_relu_kernel,
        out_shape=jax.ShapeDtypeStruct((N, Cout, HWp), out_dtype),
        grid=(N, num_te),
        in_specs=[
            pl.BlockSpec((1, Cout, TILE_E), lambda n, t: (n, 0, t)),
            pl.BlockSpec((Cout, 1), lambda n, t: (0, 0)),
            pl.BlockSpec((Cout, 1), lambda n, t: (0, 0)),
        ],
        out_specs=pl.BlockSpec((1, Cout, TILE_E), lambda n, t: (n, 0, t)),
        compiler_params=pltpu.CompilerParams(
            dimension_semantics=("parallel", "parallel")),
        input_output_aliases=aliases,
    )(conv_out, scale, shift)

    # (N, Cout, HW) -> (N, Cout, Hout, Wout): free reshape, output is already NCHW.
    return out_flat[:, :, :HW].reshape(N, Cout, Hout, Wout)


def _reference(x, weight, bias, gamma, beta, stride, padding, eps):
    """Pure-JAX (XLA conv) reference with identical semantics."""
    conv = lax.conv_general_dilated(
        x, weight, window_strides=(stride, stride),
        padding=((padding, padding), (padding, padding)),
        dimension_numbers=('NCHW', 'OIHW', 'NCHW'))
    if bias is not None:
        conv = conv + bias.reshape(1, -1, 1, 1)
    mean = jnp.mean(conv, axis=(0, 2, 3), keepdims=True)
    var = jnp.mean((conv - mean) ** 2, axis=(0, 2, 3), keepdims=True)
    y = (conv - mean) * lax.rsqrt(var + eps) * gamma.reshape(1, -1, 1, 1) \
        + beta.reshape(1, -1, 1, 1)
    return jnp.maximum(y, 0.0)


if __name__ == "__main__":
    # Shapes consistent with the module: in_channels=4, out_channels=8,
    # Conv2d(kernel_size=3, stride=1, padding=1) so spatial size is preserved.
    N, Cin, H, W = 2, 4, 16, 16
    Cout, K, STRIDE, PAD = 8, 3, 1, 1
    EPS = 1e-5   # nn.BatchNorm2d default

    key = jax.random.PRNGKey(0)
    kx, kw, kg, kb = jax.random.split(key, 4)
    x = jax.random.normal(kx, (N, Cin, H, W), jnp.float32)
    weight = jax.random.normal(kw, (Cout, Cin, K, K), jnp.float32) * 0.1
    bias = None   # typical pcdet usage passes bias=False (BN follows conv)
    gamma = jax.random.uniform(kg, (Cout,), jnp.float32, 0.5, 1.5)
    beta = jax.random.normal(kb, (Cout,), jnp.float32) * 0.1

    out = basic_block_2d(x, weight, bias, gamma, beta,
                         stride=STRIDE, padding=PAD, eps=EPS)
    out = jax.block_until_ready(out)
    assert out.shape == (N, Cout, H, W), out.shape

    ref = _reference(x, weight, bias, gamma, beta, STRIDE, PAD, EPS)
    max_err = float(jnp.max(jnp.abs(out - ref)))
    if not max_err < 1e-3:
        raise SystemExit(f"mismatch vs reference: max abs err = {max_err}")

    print("KERNEL_OK")
</pallas_src>

<mosaic_0001>
module attributes {stable_mosaic.version = 11 : i64} {
  func.func @_conv_stats_kernel(%arg0: i32, %arg1: i32, %arg2: memref<1x36x256xf32, #tpu.memory_space<vmem>>, %arg3: memref<8x36xf32, #tpu.memory_space<vmem>>, %arg4: memref<8x1xf32, #tpu.memory_space<vmem>>, %arg5: memref<1x8x256xf32, #tpu.memory_space<vmem>>, %arg6: memref<1x1x8x2xf32, #tpu.memory_space<vmem>>) attributes {dimension_semantics = [#tpu.dimension_semantics<parallel>, #tpu.dimension_semantics<parallel>], iteration_bounds = array<i64: 2, 1>, scalar_prefetch = 0 : i64, scratch_operands = 0 : i64, tpu.core_type = #tpu.core_type<tc>, window_params = [{transform_indices = @transform_0, window_bounds = array<i64: 1, 36, 256>}, {pipeline_mode = #tpu.pipeline_mode<synchronous>, transform_indices = @transform_1, window_bounds = array<i64: 8, 36>}, {pipeline_mode = #tpu.pipeline_mode<synchronous>, transform_indices = @transform_2, window_bounds = array<i64: 8, 1>}, {transform_indices = @transform_3, window_bounds = array<i64: 1, 8, 256>}, {transform_indices = @transform_4, window_bounds = array<i64: 1, 1, 8, 2>}]} {
    %c0 = arith.constant 0 : index
    %c0_0 = arith.constant 0 : index
    %c0_1 = arith.constant 0 : index
    %0 = vector.load %arg2[%c0, %c0_0, %c0_1] : memref<1x36x256xf32, #tpu.memory_space<vmem>>, vector<1x36x256xf32>
    %1 = vector.shape_cast %0 : vector<1x36x256xf32> to vector<36x256xf32>
    %c0_2 = arith.constant 0 : index
    %c0_3 = arith.constant 0 : index
    %2 = vector.load %arg3[%c0_2, %c0_3] : memref<8x36xf32, #tpu.memory_space<vmem>>, vector<8x36xf32>
    %cst = arith.constant dense<0.000000e+00> : vector<8x256xf32>
    %3 = tpu.matmul %2, %1, %cst {dimension_numbers = #tpu.dot_dimension_numbers<[1], [0], [0], [1], [0, 0, 1, 1], [], []>} : vector<8x36xf32>, vector<36x256xf32>, vector<8x256xf32> -> vector<8x256xf32>
    %c0_4 = arith.constant 0 : index
    %c0_5 = arith.constant 0 : index
    %4 = vector.load %arg4[%c0_4, %c0_5] : memref<8x1xf32, #tpu.memory_space<vmem>>, vector<8x1xf32>
    %5 = vector.broadcast %4 : vector<8x1xf32> to vector<8x256xf32>
    %6 = arith.addf %3, %5 : vector<8x256xf32>
    %c0_6 = arith.constant 0 : index
    %c0_7 = arith.constant 0 : index
    %c0_8 = arith.constant 0 : index
    %7 = vector.load %arg5[%c0_6, %c0_7, %c0_8] : memref<1x8x256xf32, #tpu.memory_space<vmem>>, vector<1x8x256xf32>
    %8 = vector.shape_cast %7 : vector<1x8x256xf32> to vector<8x256xf32>
    %9 = vector.shape_cast %6 : vector<8x256xf32> to vector<1x8x256xf32>
    tpu.vector_store %arg5[%c0_6, %c0_7, %c0_8], %9 {strides = array<i32>} : memref<1x8x256xf32, #tpu.memory_space<vmem>>, vector<1x8x256xf32>,
    %cst_9 = arith.constant dense<0.000000e+00> : vector<8xf32>
    %10 = vector.multi_reduction <add>, %6, %cst_9 [1] : vector<8x256xf32> to vector<8xf32>
    %11 = vector.shape_cast %10 : vector<8xf32> to vector<8x1xf32>
    %12 = arith.mulf %6, %6 : vector<8x256xf32>
    %cst_10 = arith.constant dense<0.000000e+00> : vector<8xf32>
    %13 = vector.multi_reduction <add>, %12, %cst_10 [1] : vector<8x256xf32> to vector<8xf32>
    %14 = vector.shape_cast %13 : vector<8xf32> to vector<8x1xf32>
    %15 = tpu.concatenate %11, %14 in 1 : vector<8x1xf32>, vector<8x1xf32> -> vector<8x2xf32>
    %c0_11 = arith.constant 0 : index
    %c0_12 = arith.constant 0 : index
    %c0_13 = arith.constant 0 : index
    %c0_14 = arith.constant 0 : index
    %16 = vector.load %arg6[%c0_11, %c0_12, %c0_13, %c0_14] : memref<1x1x8x2xf32, #tpu.memory_space<vmem>>, vector<1x1x8x2xf32>
    %17 = vector.shape_cast %16 : vector<1x1x8x2xf32> to vector<8x2xf32>
    %18 = vector.shape_cast %15 : vector<8x2xf32> to vector<1x1x8x2xf32>
    tpu.vector_store %arg6[%c0_11, %c0_12, %c0_13, %c0_14], %18 {strides = array<i32>} : memref<1x1x8x2xf32, #tpu.memory_space<vmem>>, vector<1x1x8x2xf32>,
    return
  }
  func.func @transform_0(%arg0: i32, %arg1: i32) -> (i32, i32, i32) {
    %c0_i32 = arith.constant 0 : i32
    %c0_i32_0 = arith.constant 0 : i32
    return %arg0, %c0_i32, %arg1 : i32, i32, i32
  }
  func.func @transform_1(%arg0: i32, %arg1: i32) -> (i32, i32) {
    %c0_i32 = arith.constant 0 : i32
    %c0_i32_0 = arith.constant 0 : i32
    %c0_i32_1 = arith.constant 0 : i32
    return %c0_i32, %c0_i32_0 : i32, i32
  }
  func.func @transform_2(%arg0: i32, %arg1: i32) -> (i32, i32) {
    %c0_i32 = arith.constant 0 : i32
    %c0_i32_0 = arith.constant 0 : i32
    %c0_i32_1 = arith.constant 0 : i32
    return %c0_i32, %c0_i32_0 : i32, i32
  }
  func.func @transform_3(%arg0: i32, %arg1: i32) -> (i32, i32, i32) {
    %c0_i32 = arith.constant 0 : i32
    %c0_i32_0 = arith.constant 0 : i32
    return %arg0, %c0_i32, %arg1 : i32, i32, i32
  }
  func.func @transform_4(%arg0: i32, %arg1: i32) -> (i32, i32, i32, i32) {
    %c0_i32 = arith.constant 0 : i32
    %c0_i32_0 = arith.constant 0 : i32
    %c0_i32_1 = arith.constant 0 : i32
    return %arg0, %arg1, %c0_i32, %c0_i32_0 : i32, i32, i32, i32
  }
}

</mosaic_0001>

<llo_original>
// kernel: tpu_custom_call.1
$region0: #{tpu_custom_call.1}
  #allocation0 [shape = 'u32[]', space=smem, size = 0x4, offset = 0x4, fixed_abs, tag = 'smem constant byte address 0x4 - core index']
  #allocation1 [shape = 'u32[144,128]{1,0:T(1,128)}', space=vmem, size = 0x12000, scoped, tag = 'internal scratch']
  %s0 = inlined_call_operand.vmem [shape: f32[2,36,256], index: 0, kind: input, shape index: {}]
  %s1 = inlined_call_operand.vmem [shape: f32[8,36], index: 1, kind: input, shape index: {}]
  %s2 = inlined_call_operand.vmem [shape: f32[8,1], index: 2, kind: input, shape index: {}]
  %s3 = inlined_call_operand.hbm [shape: f32[2,8,256], index: 3, kind: output, shape index: {0}]
  %s4 = inlined_call_operand.vmem [shape: f32[2,1,8,2], index: 4, kind: output, shape index: {1}]
  %5 = xla_tuple %s3, %s4
  %s6 = sld [smem:[#allocation0]]
  $region53: #{tpu_custom_call.1} parent=0
    _
  %s8 = ssub.s32 1, %s6
  %s9 = scalar_select 0, %s8, %s6
  $region1: #{tpu_custom_call.1} parent=0
    #allocation2 [shape = 'u8[16384]{0}', space=vmem, size = 0x4000, scoped, tag = 'output window, operand 0']
    #allocation3 [shape = 's32[2]{0}', space=sflag, size = 0x8, scoped, tag = 'scoped memory for tpu_custom_call.1']
    %10 = vsyncpa [#allocation3], 0
    %s11 = scalar_lea.sflag [#allocation3], 1
    %12 = vsyncpa %s11, 0
    loop: start=0, step=1, limit=4
    $region2: #{tpu_custom_call.1} parent=1 // loop_pre_header
      _
    $region3: #{tpu_custom_call.1} parent=1 // loop_header
      %s14 = sphi 0, %s18
      %p15 = scmp.ge.s32.totalorder %s14, 4
      %s21 = sphi 0, %s33
      %s22 = sphi 0, %s29
      %s23 = sphi 0, %s21
      %s24 = sphi 0, %s22
      %s25 = sphi 0, %s23
      %s26 = sphi 0, %s24
      %s38 = sphi 0, %s40
      %s41 = sphi 0, %s38
      %s42 = sphi 0, %s41
      %s58 = sphi 0, %s42
      %s62 = sphi 0, %s62
      %s64 = sphi 0, %s62
      %s65 = sphi 0, %s64
      %s79 = sphi 0, %s65
      %s83 = sphi 0, %s83
      %s85 = sphi 0, %s83
      %s86 = sphi 0, %s85
      %s100 = sphi 0, %s86
      %s108 = sphi 0, %s110
      %s111 = sphi 0, %s108
      %s112 = sphi 0, %s111
      %s128 = sphi 0, %s112
      %s136 = sphi 0, %s138
      %s139 = sphi 0, %s136
      %s140 = sphi 0, %s139
      %s156 = sphi 0, %s140
    $region4: #{tpu_custom_call.1} parent=1 // loop_header_branch
      %17 = sbr.rel (%p15) target = $region8
    $region5: #{tpu_custom_call.1} parent=1 // loop_body
      %s19 = ssub.s32 %s14, 1
      %s20 = ssub.s32 %s14, 2
      %s27 = sadd.s32 1, %s22
      %p28 = scmp.ge.s32.totalorder %s27, 1
      %s29 = scalar_select %p28, 0, %s27
      %s30 = sadd.s32 1, %s21
      %s31 = scalar_select %p28, %s30, %s21
      %p32 = scmp.ge.s32.totalorder %s31, 2
      %s33 = scalar_select %p32, 0, %s31
      %s34 = ssub.s32 %s21, %s33
      %s35 = ssub.s32 %s22, %s29
      %s36 = sor.u32 %s34, %s35
      %p37 = scmp.eq.s32.totalorder %s36, 0
      %s39 = sadd.s32 %s38, 1
      %s40 = scalar_select %p37, %s38, %s39
      %p43 = pneg %p37
      %p44 = scmp.eq.s32.totalorder %s14, 1
      %p45 = por %p43, %p44
      %p46 = scmp.ne.s32.totalorder %s38, %s41
      %p47 = scmp.eq.s32.totalorder %s14, 0
      %p48 = por %p46, %p47
      %p49 = scmp.ne.s32.totalorder %s38, %s41
      %p50 = scmp.eq.s32.totalorder %s19, 1
      %p51 = por %p49, %p50
      %p52 = scmp.ne.s32.totalorder %s41, %s42
      %p53 = scmp.eq.s32.totalorder %s19, 0
      %p54 = por %p52, %p53
      %p55 = scmp.ne.s32.totalorder %s41, %s42
      %p56 = scmp.eq.s32.totalorder %s20, 1
      %p57 = por %p55, %p56
      %p59 = scmp.ne.s32.totalorder %s42, %s58
      %p60 = scmp.eq.s32.totalorder %s20, 0
      %p61 = por %p59, %p60
      %s63 = sadd.s32 %s62, 1
      %p66 = scmp.eq.s32.totalorder %s14, 1
      %p67 = scmp.ne.s32.totalorder %s62, %s64
      %p68 = scmp.eq.s32.totalorder %s14, 0
      %p69 = por %p67, %p68
      %p70 = scmp.ne.s32.totalorder %s62, %s64
      %p71 = scmp.eq.s32.totalorder %s19, 1
      %p72 = por %p70, %p71
      %p73 = scmp.ne.s32.totalorder %s64, %s65
      %p74 = scmp.eq.s32.totalorder %s19, 0
      %p75 = por %p73, %p74
      %p76 = scmp.ne.s32.totalorder %s64, %s65
      %p77 = scmp.eq.s32.totalorder %s20, 1
      %p78 = por %p76, %p77
      %p80 = scmp.ne.s32.totalorder %s65, %s79
      %p81 = scmp.eq.s32.totalorder %s20, 0
      %p82 = por %p80, %p81
      %s84 = sadd.s32 %s83, 1
      %p87 = scmp.eq.s32.totalorder %s14, 1
      %p88 = scmp.ne.s32.totalorder %s83, %s85
      %p89 = scmp.eq.s32.totalorder %s14, 0
      %p90 = por %p88, %p89
      %p91 = scmp.ne.s32.totalorder %s83, %s85
      %p92 = scmp.eq.s32.totalorder %s19, 1
      %p93 = por %p91, %p92
      %p94 = scmp.ne.s32.totalorder %s85, %s86
      %p95 = scmp.eq.s32.totalorder %s19, 0
      %p96 = por %p94, %p95
      %p97 = scmp.ne.s32.totalorder %s85, %s86
      %p98 = scmp.eq.s32.totalorder %s20, 1
      %p99 = por %p97, %p98
      %p101 = scmp.ne.s32.totalorder %s86, %s100
      %p102 = scmp.eq.s32.totalorder %s20, 0
      %p103 = por %p101, %p102
      %s104 = ssub.s32 %s21, %s33
      %s105 = ssub.s32 %s22, %s29
      %s106 = sor.u32 %s104, %s105
      %p107 = scmp.eq.s32.totalorder %s106, 0
      %s109 = sadd.s32 %s108, 1
      %s110 = scalar_select %p107, %s108, %s109
      %p113 = pneg %p107
      %p114 = scmp.eq.s32.totalorder %s14, 1
      %p115 = por %p113, %p114
      %p116 = scmp.ne.s32.totalorder %s108, %s111
      %p117 = scmp.eq.s32.totalorder %s14, 0
      %p118 = por %p116, %p117
      %p119 = scmp.ne.s32.totalorder %s108, %s111
      %p120 = scmp.eq.s32.totalorder %s19, 1
      %p121 = por %p119, %p120
      %p122 = scmp.ne.s32.totalorder %s111, %s112
      %p123 = scmp.eq.s32.totalorder %s19, 0
      %p124 = por %p122, %p123
      %p125 = scmp.ne.s32.totalorder %s111, %s112
      %p126 = scmp.eq.s32.totalorder %s20, 1
      %p127 = por %p125, %p126
      %p129 = scmp.ne.s32.totalorder %s112, %s128
      %p130 = scmp.eq.s32.totalorder %s20, 0
      %p131 = por %p129, %p130
      %s132 = ssub.s32 %s21, %s33
      %s133 = ssub.s32 %s22, %s29
      %s134 = sor.u32 %s132, %s133
      %p135 = scmp.eq.s32.totalorder %s134, 0
      %s137 = sadd.s32 %s136, 1
      %s138 = scalar_select %p135, %s136, %s137
      %p141 = pneg %p135
      %p142 = scmp.eq.s32.totalorder %s14, 1
      %p143 = por %p141, %p142
      %p144 = scmp.ne.s32.totalorder %s136, %s139
      %p145 = scmp.eq.s32.totalorder %s14, 0
      %p146 = por %p144, %p145
      %p147 = scmp.ne.s32.totalorder %s136, %s139
      %p148 = scmp.eq.s32.totalorder %s19, 1
      %p149 = por %p147, %p148
      %p150 = scmp.ne.s32.totalorder %s139, %s140
      %p151 = scmp.eq.s32.totalorder %s19, 0
      %p152 = por %p150, %p151
      %p153 = scmp.ne.s32.totalorder %s139, %s140
      %p154 = scmp.eq.s32.totalorder %s20, 1
      %p155 = por %p153, %p154
      %p157 = scmp.ne.s32.totalorder %s140, %s156
      %p158 = scmp.eq.s32.totalorder %s20, 0
      %p159 = por %p157, %p158
      %p160 = scmp.le.s32.totalorder 1, %s14
      %p161 = scmp.lt.s32.totalorder %s14, 3
      %p162 = pnand %p160, %p161
      %p163 = pneg %p162
      // Predicated region
      $region9: #{tpu_custom_call.1} parent=5 // pred_check
        _
      $region10: #{tpu_custom_call.1} parent=5 // pred_check_branch
        %165 = sbr.rel (%p162) target = $region12
      $region11: #{tpu_custom_call.1} parent=5 // pred_region
        %s166 = ssub.s32 %s14, 1
        // Predicated region
        $region13: #{tpu_custom_call.1} parent=11 // pred_check
          %p167 = pneg %p75
        $region14: #{tpu_custom_call.1} parent=11 // pred_check_branch
          %169 = sbr.rel (%p167) target = $region16
        $region15: #{tpu_custom_call.1} parent=11 // pred_region
          _
        $region16: #{tpu_custom_call.1} parent=11 // pred_fallthru
          _
        // Predicated region
        $region17: #{tpu_custom_call.1} parent=11 // pred_check
          %p170 = pneg %p96
        $region18: #{tpu_custom_call.1} parent=11 // pred_check_branch
          %172 = sbr.rel (%p170) target = $region20
        $region19: #{tpu_custom_call.1} parent=11 // pred_region
          _
        $region20: #{tpu_custom_call.1} parent=11 // pred_fallthru
          _
      $region12: #{tpu_custom_call.1} parent=5 // pred_fallthru
        _
      %p173 = scmp.lt.s32.totalorder %s14, 2
      // Predicated region
      $region21: #{tpu_custom_call.1} parent=5 // pred_check
        %p174 = pneg %p173
      $region22: #{tpu_custom_call.1} parent=5 // pred_check_branch
        %176 = sbr.rel (%p174) target = $region24
      $region23: #{tpu_custom_call.1} parent=5 // pred_region
        // Predicated region
        $region25: #{tpu_custom_call.1} parent=23 // pred_check
          %p177 = pneg %p48
        $region26: #{tpu_custom_call.1} parent=23 // pred_check_branch
          %179 = sbr.rel (%p177) target = $region28
        $region27: #{tpu_custom_call.1} parent=23 // pred_region
          %s180 = smul.u32 2, %s22
          %p181 = scmp.lt.s32.totalorder %s21, 1
          %s182 = scalar_select %p181, %s21, 1
          %p183 = scmp.lt.s32.totalorder %s180, 1
          %s184 = scalar_select %p183, %s180, 1
          %s185 = smul.addr %s182, 10
          %s186 = sadd.s32 %s184, %s185
          %s187 = smul.addr %s186, 8
          %s188 = scalar_lea.vmem %s0, %s187
          %s189 = smul.u32 2, %s22
        $region28: #{tpu_custom_call.1} parent=23 // pred_fallthru
          _
      $region24: #{tpu_custom_call.1} parent=5 // pred_fallthru
        _
      %p190 = scmp.le.s32.totalorder 1, %s14
      %p191 = scmp.lt.s32.totalorder %s14, 3
      %p192 = pnand %p190, %p191
      %p193 = pneg %p192
      // Predicated region
      $region29: #{tpu_custom_call.1} parent=5 // pred_check
        _
      $region30: #{tpu_custom_call.1} parent=5 // pred_check_branch
        %195 = sbr.rel (%p192) target = $region32
      $region31: #{tpu_custom_call.1} parent=5 // pred_region
        %s196 = ssub.s32 %s14, 1
        %s197 = smul.u32 2, %s24
        %p198 = scmp.lt.s32.totalorder %s23, 1
        %s199 = scalar_select %p198, %s23, 1
        %p200 = scmp.lt.s32.totalorder %s197, 1
        %s201 = scalar_select %p200, %s197, 1
        %s202 = smul.addr %s199, 10
        %s203 = sadd.s32 %s201, %s202
        %s204 = smul.addr %s203, 8
        %s205 = scalar_lea.vmem %s0, %s204
        %p206 = pneg %p54
        %p207 = pneg %p51
        %p208 = pneg %p75
        %p209 = pneg %p72
        %p210 = pneg %p96
        %p211 = pneg %p93
        %p212 = pneg %p124
        %p213 = pneg %p121
        %s214 = sand.u32 %s111, 1
        %s215 = scalar_lea.sflag [#allocation3], %s214
        %s216 = sand.u32 %s111, 1
        %s217 = smul.addr %s216, 16
        %s218 = scalar_lea.vmem [#allocation2], %s217
        %p219 = pneg %p152
        %p220 = pneg %p149
        %p221 = scmp.lt.s32.totalorder %s23, 1
        %s222 = scalar_select %p221, %s23, 1
        %p223 = scmp.lt.s32.totalorder %s24, 0
        %s224 = scalar_select %p223, %s24, 0
        %s225 = sadd.s32 %s224, %s222
        %s226 = smul.addr %s225, 8
        %s227 = scalar_lea.vmem %s4, %s226
        %s228 = smul.u32 2, %s24
        %p229 = scmp.lt.s32.totalorder %s23, 1
        %s230 = scalar_select %p229, %s23, 1
        %p231 = scmp.lt.s32.totalorder %s228, 1
        %s232 = scalar_select %p231, %s228, 1
        %s233 = smul.addr %s230, 10
        %s234 = sadd.s32 %s232, %s233
        %s235 = smul.addr %s234, 8
        %s236 = scalar_lea.vmem %s0, %s235
        %s237 = smul.u32 2, %s24
        %s238 = smul.u32 2, %s24
        %p239 = scmp.lt.s32.totalorder %s23, 1
        %s240 = scalar_select %p239, %s23, 1
        %p241 = scmp.lt.s32.totalorder %s24, 0
        %s242 = scalar_select %p241, %s24, 0
        %s243 = sadd.s32 %s242, %s240
        %s244 = smul.addr %s243, 8
        %s245 = scalar_lea.vmem %s4, %s244
        %v246 = vld [vmem:[%s236] sm:$0xff]
        %v247 = vld [vmem:[%s236 + $0x8] sm:$0xff]
        %v248 = vld [vmem:[%s236 + $0x10] sm:$0xff]
        %v249 = vld [vmem:[%s236 + $0x18] sm:$0xff]
        %v250 = vld [vmem:[%s236 + $0x20] sm:$0xff]
        %v251 = vld [vmem:[%s236 + $0x28] sm:$0xff]
        %v252 = vld [vmem:[%s236 + $0x30] sm:$0xff]
        %v253 = vld [vmem:[%s236 + $0x38] sm:$0xff]
        %v254 = vld [vmem:[%s236 + $0x40] sm:$0xf]
        %v255 = vld [vmem:[%s236 + $0x48] sm:$0xf]
        %v256 = vld [vmem:[%s1] sm:$0xff]
        %v257 = vld [vmem:[%s2] sm:$0xff]
        %259 = vset.pattern.permute.xlu0 0
        %260 = vperm.xlu0 %259, %v257
        %v261 = vpop.permute.xlu0 %260
        %vm263 = vcmask 293888
        %v265 = vsel %vm263, %v256, 0
        %vm267 = vcmask 1043456
        %v269 = vsel %vm267, %v254, 0
        %v272 = vsel %vm267, %v255, 0
        %274 = vmatprep.subr.mxu0 %v247
        %275 = vmatpush1.msra.mxu0 %v246
        %276 = vmatprep.subr.mxu0 %v249
        %277 = vmatpush1.msra.mxu0 %v248
        %278 = vmatprep.subr.mxu0 %v251
        %279 = vmatpush1.msra.mxu0 %v250
        %280 = vmatprep.subr.mxu0 %v253
        %281 = vmatpush1.msra.mxu0 %v252
        %282 = vmatprep.subr.mxu0 %v272
        %283 = vmatpush1.msra.mxu0 %v269
        %284 = vmatprep.subr.mxu0 0.0
        %285 = vmatpush1.msra.mxu0 0.0
        %286 = vmatprep.subr.mxu0 0.0
        %287 = vmatpush1.msra.mxu0 0.0
        %288 = vmatprep.subr.mxu0 0.0
        %289 = vmatpush1.msra.mxu0 0.0
        %290 = vmatprep.subr.mxu0 0.0
        %291 = vmatpush1.msra.mxu0 0.0
        %292 = vmatprep.subr.mxu0 0.0
        %293 = vmatpush1.msra.mxu0 0.0
        %294 = vmatprep.subr.mxu0 0.0
        %295 = vmatpush1.msra.mxu0 0.0
        %296 = vmatprep.subr.mxu0 0.0
        %297 = vmatpush1.msra.mxu0 0.0
        %298 = vmatprep.subr.mxu0 0.0
        %299 = vmatpush1.msra.mxu0 0.0
        %300 = vmatprep.subr.mxu0 0.0
        %301 = vmatpush1.msra.mxu0 0.0
        %302 = vmatprep.subr.mxu0 0.0
        %303 = vmatpush1.msra.mxu0 0.0
        %304 = vmatprep.subr.mxu0 0.0
        %305 = vmatpush1.msra.mxu0 0.0
        %306 = vmatprep.subr.mxu0 0.0
        %307 = vmatpush1.msra.mxu0 0.0
        %308 = vmatprep.subr.mxu0 0.0
        %309 = vmatpush1.msra.mxu0 0.0
        %310 = vmatprep.subr.mxu0 0.0
        %311 = vmatpush1.msra.mxu0 0.0
        %312 = vmatprep.subr.mxu0 0.0
        %313 = vmatpush1.msra.mxu0 0.0
        %314 = vmatprep.subr.mxu0 0.0
        %315 = vmatpush1.msra.mxu0 0.0
        %316 = vmatprep.subr.mxu0 0.0
        %317 = vmatpush1.msra.mxu0 0.0
        %318 = vmatprep.subr.mxu0 0.0
        %319 = vmatpush1.msra.mxu0 0.0
        %320 = vmatprep.subr.mxu0 0.0
        %321 = vmatpush1.msra.mxu0 0.0
        %322 = vmatprep.subr.mxu0 0.0
        %323 = vmatpush1.msra.mxu0 0.0
        %324 = vmatprep.subr.mxu0 0.0
        %325 = vmatpush1.msra.mxu0 0.0
        %326 = vmatprep.subr.mxu0 0.0
        %327 = vmatpush1.msra.mxu0 0.0
        %328 = vmatprep.subr.mxu0 0.0
        %329 = vmatpush1.msra.mxu0 0.0
        %330 = vmatprep.subr.mxu0 0.0
        %331 = vmatpush1.msra.mxu0 0.0
        %332 = vmatprep.subr.mxu0 0.0
        %333 = vmatpush1.msra.mxu0 0.0
        %334 = vmatprep.subr.mxu0 0.0
        %335 = vmatpush1.msra.mxu0 0.0
        %336 = vmatprep.subr.mxu0 0.0
        %337 = vmatpush1.msra.mxu0 0.0
        %338 = vmatprep.mubr.f32.mxu0 0.0
        %339 = vmatmul.mubr.f32.gmra.mrb[0].mxu0 %v265
        %v340 = vpop.f32.mrb[0].mxu0
        %v341 = vadd.f32 %v261, %v340
        %v342 = vpop.f32.mrb[0].mxu0
        %v343 = vadd.f32 %v261, %v342
        %344 = vdwg.mxu0
        %345 = vst [vmem:[%s218] sm:$0xff] %v341
        %346 = vst [vmem:[%s218 + $0x8] sm:$0xff] %v343
        %v347 = vadd.f32 %v341, %v343
        %348 = vadd.xlane.f32.xlu0 %v347
        %v349 = vpop.xlane.xlu0 %348
        %v350 = vmul.f32 %v341, %v341
        %v351 = vmul.f32 %v343, %v343
        %v352 = vadd.f32 %v350, %v351
        %353 = vadd.xlane.f32.xlu0 %v352
        %v354 = vpop.xlane.xlu0 %353
        %vm355 = vcmask 7168
        %v356 = vsel %vm355, %v349, %v354
        %vm357 = vcmask 15360
        %358 = vst.msk [vmem:[%s245] sm:$0xff] %vm357, %v356
        %s359 = sand.u32 %s111, 1
        %s360 = scalar_lea.sflag [#allocation3], %s359
        %s361 = sand.u32 %s111, 1
        %s362 = smul.addr %s361, 16
        %s363 = scalar_lea.vmem [#allocation2], %s362
        %p364 = scmp.lt.s32.totalorder %s23, 1
        %s365 = scalar_select %p364, %s23, 1
        %p366 = scmp.lt.s32.totalorder %s24, 0
        %s367 = scalar_select %p366, %s24, 0
        %s368 = sadd.s32 %s367, %s365
        %s369 = smul.addr %s368, 8
        %s370 = scalar_lea.vmem %s4, %s369
        // Predicated region
        $region33: #{tpu_custom_call.1} parent=31 // pred_check
          %p371 = pneg %p121
        $region34: #{tpu_custom_call.1} parent=31 // pred_check_branch
          %373 = sbr.rel (%p371) target = $region36
        $region35: #{tpu_custom_call.1} parent=31 // pred_region
          %s374 = smul.u32 2, %s24
          %s376 = ssub.s32 256, 256
          %377 = vsyncadd %s360, %s376
          %s378 = smul.addr %s23, 2
          %s379 = sadd.s32 %s374, %s378
          %s380 = smul.addr %s379, 128
          %s381 = scalar_lea.hbm %s3, %s380
          %s383 = sshll.u32 %s363, 4
          %s384 = int_to_ptr.vmem [resolvable:$true] %s383
          %386 = dma.vmem_to_hbm [thread:$0]  %s384, 256, %s381, %s360
        $region36: #{tpu_custom_call.1} parent=31 // pred_fallthru
          _
        // Predicated region
        $region37: #{tpu_custom_call.1} parent=31 // pred_check
          %p387 = pneg %p149
        $region38: #{tpu_custom_call.1} parent=31 // pred_check_branch
          %389 = sbr.rel (%p387) target = $region40
        $region39: #{tpu_custom_call.1} parent=31 // pred_region
          _
        $region40: #{tpu_custom_call.1} parent=31 // pred_fallthru
          _
      $region32: #{tpu_custom_call.1} parent=5 // pred_fallthru
        _
      %p390 = scmp.le.s32.totalorder 2, %s14
      // Predicated region
      $region41: #{tpu_custom_call.1} parent=5 // pred_check
        %p391 = pneg %p390
      $region42: #{tpu_custom_call.1} parent=5 // pred_check_branch
        %393 = sbr.rel (%p391) target = $region44
      $region43: #{tpu_custom_call.1} parent=5 // pred_region
        %s394 = ssub.s32 %s14, 2
        // Predicated region
        $region45: #{tpu_custom_call.1} parent=43 // pred_check
          %p395 = pneg %p127
        $region46: #{tpu_custom_call.1} parent=43 // pred_check_branch
          %397 = sbr.rel (%p395) target = $region48
        $region47: #{tpu_custom_call.1} parent=43 // pred_region
          %s398 = sand.u32 %s112, 1
          %s399 = scalar_lea.sflag [#allocation3], %s398
          %s400 = sand.u32 %s112, 1
          %s401 = smul.addr %s400, 16
          %s402 = scalar_lea.vmem [#allocation2], %s401
          %403 = dma.done %s399, 256
        $region48: #{tpu_custom_call.1} parent=43 // pred_fallthru
          _
        // Predicated region
        $region49: #{tpu_custom_call.1} parent=43 // pred_check
          %p404 = pneg %p155
        $region50: #{tpu_custom_call.1} parent=43 // pred_check_branch
          %406 = sbr.rel (%p404) target = $region52
        $region51: #{tpu_custom_call.1} parent=43 // pred_region
          %p407 = scmp.lt.s32.totalorder %s25, 1
          %s408 = scalar_select %p407, %s25, 1
          %p409 = scmp.lt.s32.totalorder %s26, 0
          %s410 = scalar_select %p409, %s26, 0
          %s411 = sadd.s32 %s410, %s408
          %s412 = smul.addr %s411, 8
          %s413 = scalar_lea.vmem %s4, %s412
        $region52: #{tpu_custom_call.1} parent=43 // pred_fallthru
          _
      $region44: #{tpu_custom_call.1} parent=5 // pred_fallthru
        _
    $region6: #{tpu_custom_call.1} parent=1 // loop_footer
      %s18 = sadd.s32 1, %s14
    $region7: #{tpu_custom_call.1} parent=1 // loop_footer_branch
      %13 = sbr.rel target = $region3
    $region8: #{tpu_custom_call.1} parent=1 // loop_exit
      _
    %414 = vsyncpa [#allocation3], 1
    %s415 = scalar_lea.sflag [#allocation3], 1
    %416 = vsyncpa %s415, 1

</llo_original>
